<compile_context>
chip_gen: v7x
topology: tpu7x:2x2x1
jax: 0.10.0
libtpu: 0.0.40
codegen_flags: <defaults>
</compile_context>

<pallas_src>
import math

import jax
import jax.numpy as jnp
from jax.experimental import pallas as pl
from jax.experimental.pallas import tpu as pltpu

MAXOUT_WINDOW = 4
LANE = 128        # TPU lane width: feature dims padded to multiples of this
SUBLANE = 8       # f32 sublane; batch tiles are multiples of this
TILE_B_MAX = 256  # batch rows per grid step (fills MXU M on all generations)


def _round_up(n, m):
    return ((n + m - 1) // m) * m


# ----------------------------- Pallas kernel -------------------------------- #

def _make_encoder_kernel(num_hidden_layers: int, window: int):
    """kernel(x, (W,b)*L, W_head, b_head, mv_out, h_out)."""

    def kernel(*refs):
        idx = 0
        x_ref = refs[idx]; idx += 1
        h = x_ref[...]                                   # f32 activations

        # Hidden layers: Linear (MXU) + MaxOut(window) over lane-aligned slices.
        for _ in range(num_hidden_layers):
            w_ref = refs[idx]; b_ref = refs[idx + 1]; idx += 2
            y = jnp.dot(h.astype(w_ref.dtype), w_ref[...],
                        preferred_element_type=jnp.float32) + b_ref[...]
            gp = y.shape[-1] // window                   # padded group count (x128)
            m = y[:, 0:gp]
            for k in range(1, window):                   # full-vreg VPU maxima
                m = jnp.maximum(m, y[:, k * gp:(k + 1) * gp])
            h = m

        # Fused (mean | var) head: one matmul, one lane-dense store.
        wh_ref = refs[idx]; bh_ref = refs[idx + 1]; idx += 2
        mv_ref = refs[idx]; h_out_ref = refs[idx + 1]
        head = jnp.dot(h.astype(wh_ref.dtype), wh_ref[...],
                       preferred_element_type=jnp.float32) + bh_ref[...]
        mv_ref[...] = head.astype(mv_ref.dtype)
        h_out_ref[...] = h.astype(h_out_ref.dtype)

    return kernel


# ------------------------------ Parameter setup ----------------------------- #

def init_encoder_params(key, dim_input, hidden_dims, latent_size,
                        window=MAXOUT_WINDOW):
    """Deterministic init mimicking nn.Linear's uniform(-1/sqrt(fan_in), ...)."""
    params = {"hidden": []}
    in_dim = dim_input
    for out_dim in hidden_dims:
        key, kw, kb = jax.random.split(key, 3)
        bound = 1.0 / math.sqrt(in_dim)
        W = jax.random.uniform(kw, (out_dim, in_dim), jnp.float32, -bound, bound)
        b = jax.random.uniform(kb, (out_dim,), jnp.float32, -bound, bound)
        params["hidden"].append((W, b))
        in_dim = out_dim // window
    for name in ("fc_mean", "fc_var"):
        key, kw, kb = jax.random.split(key, 3)
        bound = 1.0 / math.sqrt(in_dim)
        W = jax.random.uniform(kw, (latent_size, in_dim), jnp.float32, -bound, bound)
        b = jax.random.uniform(kb, (latent_size,), jnp.float32, -bound, bound)
        params[name] = (W, b)
    return params


def prepare_kernel_params(params, window=MAXOUT_WINDOW, matmul_dtype=jnp.float32):
    """Glue: transpose to (in, out), permute + lane-pad MaxOut groups, fuse head.

    Padding is applied to the group-count axis only; padded columns have zero
    weights and zero bias, and the next layer's padded input rows are zero, so
    results on the real columns are bit-identical in structure to the unpadded
    computation.
    """
    dim_input = params["hidden"][0][0].shape[1]
    in_real = dim_input
    in_pad = _round_up(dim_input, LANE)

    hidden = []
    for W, b in params["hidden"]:
        out_dim = W.shape[0]
        g = out_dim // window
        gp = _round_up(g, LANE)
        j = jnp.arange(out_dim)
        cols = (j % window) * gp + (j // window)          # group-major, lane padded
        Wp = jnp.zeros((in_pad, window * gp), matmul_dtype)
        Wp = Wp.at[:in_real, cols].set(W.T.astype(matmul_dtype))
        bp = jnp.zeros((1, window * gp), jnp.float32).at[0, cols].set(b)
        hidden.append((Wp, bp))
        in_real, in_pad = g, gp

    latent = params["fc_mean"][0].shape[0]
    head_pad = _round_up(2 * latent, LANE)
    Wh = jnp.zeros((in_pad, head_pad), matmul_dtype)
    Wh = Wh.at[:in_real, :latent].set(params["fc_mean"][0].T.astype(matmul_dtype))
    Wh = Wh.at[:in_real, latent:2 * latent].set(params["fc_var"][0].T.astype(matmul_dtype))
    bh = jnp.zeros((1, head_pad), jnp.float32)
    bh = bh.at[0, :latent].set(params["fc_mean"][1])
    bh = bh.at[0, latent:2 * latent].set(params["fc_var"][1])

    return {
        "hidden": hidden,
        "head": (Wh, bh),
        "meta": dict(dim_input=dim_input, in_pad=_round_up(dim_input, LANE),
                     latent=latent, head_pad=head_pad,
                     h_real=in_real, h_pad=in_pad, window=window),
    }


# ------------------------------- Entry point --------------------------------- #

def encoder_forward_pallas(x, kparams):
    meta = kparams["meta"]
    window = meta["window"]
    B = x.shape[0]
    in_pad = meta["in_pad"]
    head_pad = meta["head_pad"]
    h_pad = meta["h_pad"]

    # Batch tiling: multiple of the f32 sublane, capped to fill the MXU M dim.
    tile_b = min(TILE_B_MAX, _round_up(B, SUBLANE))
    b_pad = _round_up(B, tile_b)
    grid = (b_pad // tile_b,)

    # Lane/sublane-pad the input in glue code (zeros are masked by zero W rows).
    x_p = jnp.zeros((b_pad, in_pad), jnp.float32).at[:B, :meta["dim_input"]].set(x)

    inputs = [x_p]
    in_specs = [pl.BlockSpec((tile_b, in_pad), lambda i: (i, 0))]
    flops = 0
    weight_bytes = 0
    for W, b in kparams["hidden"]:
        inputs += [W, b]
        # Constant index maps -> weights stay resident in VMEM across grid steps.
        in_specs += [pl.BlockSpec(W.shape, lambda i: (0, 0)),
                     pl.BlockSpec(b.shape, lambda i: (0, 0))]
        flops += 2 * b_pad * W.shape[0] * W.shape[1]
        weight_bytes += W.size * W.dtype.itemsize + b.size * 4
    Wh, bh = kparams["head"]
    inputs += [Wh, bh]
    in_specs += [pl.BlockSpec(Wh.shape, lambda i: (0, 0)),
                 pl.BlockSpec(bh.shape, lambda i: (0, 0))]
    flops += 2 * b_pad * Wh.shape[0] * Wh.shape[1]
    weight_bytes += Wh.size * Wh.dtype.itemsize + bh.size * 4

    out_shape = (jax.ShapeDtypeStruct((b_pad, head_pad), jnp.float32),
                 jax.ShapeDtypeStruct((b_pad, h_pad), jnp.float32))
    out_specs = (pl.BlockSpec((tile_b, head_pad), lambda i: (i, 0)),
                 pl.BlockSpec((tile_b, h_pad), lambda i: (i, 0)))

    bytes_accessed = int(x_p.size * 4 + weight_bytes
                         + b_pad * (head_pad + h_pad) * 4)

    mv, h_full = pl.pallas_call(
        _make_encoder_kernel(len(kparams["hidden"]), window),
        grid=grid,
        out_shape=out_shape,
        in_specs=in_specs,
        out_specs=out_specs,
        compiler_params=pltpu.CompilerParams(
            dimension_semantics=("parallel",),          # megacore sharding on v7x
            vmem_limit_bytes=48 * 1024 * 1024,          # fits v7x 64 MiB w/ headroom
        ),
        cost_estimate=pl.CostEstimate(
            flops=flops, transcendentals=0, bytes_accessed=bytes_accessed),
    )(*inputs)

    latent = meta["latent"]
    mean = mv[:B, :latent]
    var = mv[:B, latent:2 * latent]
    h = h_full[:B, :meta["h_real"]]
    return mean, var, h


# ------------------------------ Reference (JAX) ------------------------------ #

def encoder_forward_ref(x, params, window=MAXOUT_WINDOW):
    h = x
    for W, b in params["hidden"]:
        y = h @ W.T + b
        B, H = y.shape
        h = y.reshape(B, H // window, window).max(axis=-1)   # MaxPool1d(k=4, s=4)
    mean = h @ params["fc_mean"][0].T + params["fc_mean"][1]
    var = h @ params["fc_var"][0].T + params["fc_var"][1]
    return mean, var, h


if __name__ == "__main__":
    # TODO(synk): only the default 'MaxOut' branch of the module is implemented
    # (the 'ReLU' branch is omitted).

    # Encoder(dim_input=32, hidden_dims=[64, 64], 'MaxOut', latent_size=40)
    B, DIM_INPUT, HIDDEN_DIMS, LATENT = 8, 32, [64, 64], 40

    key = jax.random.PRNGKey(0)
    key, kx = jax.random.split(key)
    x = jax.random.normal(kx, (B, DIM_INPUT), jnp.float32)

    params = init_encoder_params(key, DIM_INPUT, HIDDEN_DIMS, LATENT)

    # --- f32 matmul path (exact; default, v5e-safe) ---
    kparams = prepare_kernel_params(params, matmul_dtype=jnp.float32)
    mean, var, h = encoder_forward_pallas(x, kparams)
    jax.block_until_ready((mean, var, h))

    mean_r, var_r, h_r = encoder_forward_ref(x, params)
    assert mean.shape == (B, LATENT) and var.shape == (B, LATENT)
    assert h.shape == (B, HIDDEN_DIMS[-1] // MAXOUT_WINDOW)
    assert jnp.allclose(mean, mean_r, atol=1e-4, rtol=1e-4)
    assert jnp.allclose(var, var_r, atol=1e-4, rtol=1e-4)
    assert jnp.allclose(h, h_r, atol=1e-4, rtol=1e-4)

    # --- bf16 matmul-operand path (v6e/v7x MXU rate; f32 accum / bias / max) ---
    kparams_bf16 = prepare_kernel_params(params, matmul_dtype=jnp.bfloat16)
    mean_b, var_b, h_b = encoder_forward_pallas(x, kparams_bf16)
    jax.block_until_ready((mean_b, var_b, h_b))
    assert jnp.allclose(mean_b, mean_r, atol=5e-2, rtol=5e-2)
    assert jnp.allclose(var_b, var_r, atol=5e-2, rtol=5e-2)
    assert jnp.allclose(h_b, h_r, atol=5e-2, rtol=5e-2)

    # --- multi-step grid smoke test (batch padding + pipelining path) ---
    key, kx2 = jax.random.split(key)
    x_big = jax.random.normal(kx2, (300, DIM_INPUT), jnp.float32)
    mean_g, var_g, h_g = encoder_forward_pallas(x_big, kparams)
    jax.block_until_ready((mean_g, var_g, h_g))
    mean_gr, var_gr, h_gr = encoder_forward_ref(x_big, params)
    assert jnp.allclose(mean_g, mean_gr, atol=1e-3, rtol=1e-3)
    assert jnp.allclose(var_g, var_gr, atol=1e-3, rtol=1e-3)
    assert jnp.allclose(h_g, h_gr, atol=1e-3, rtol=1e-3)

    print("KERNEL_OK")
</pallas_src>

<mosaic_0001>
module attributes {stable_mosaic.version = 11 : i64} {
  func.func @kernel(%arg0: i32, %arg1: memref<8x128xf32, #tpu.memory_space<vmem>>, %arg2: memref<128x512xf32, #tpu.memory_space<vmem>>, %arg3: memref<1x512xf32, #tpu.memory_space<vmem>>, %arg4: memref<128x512xf32, #tpu.memory_space<vmem>>, %arg5: memref<1x512xf32, #tpu.memory_space<vmem>>, %arg6: memref<128x128xf32, #tpu.memory_space<vmem>>, %arg7: memref<1x128xf32, #tpu.memory_space<vmem>>, %arg8: memref<8x128xf32, #tpu.memory_space<vmem>>, %arg9: memref<8x128xf32, #tpu.memory_space<vmem>>) attributes {dimension_semantics = [#tpu.dimension_semantics<parallel>], iteration_bounds = array<i64: 1>, scalar_prefetch = 0 : i64, scratch_operands = 0 : i64, tpu.core_type = #tpu.core_type<tc>, window_params = [{transform_indices = @transform_0, window_bounds = array<i64: 8, 128>}, {pipeline_mode = #tpu.pipeline_mode<synchronous>, transform_indices = @transform_1, window_bounds = array<i64: 128, 512>}, {pipeline_mode = #tpu.pipeline_mode<synchronous>, transform_indices = @transform_2, window_bounds = array<i64: 1, 512>}, {pipeline_mode = #tpu.pipeline_mode<synchronous>, transform_indices = @transform_3, window_bounds = array<i64: 128, 512>}, {pipeline_mode = #tpu.pipeline_mode<synchronous>, transform_indices = @transform_4, window_bounds = array<i64: 1, 512>}, {pipeline_mode = #tpu.pipeline_mode<synchronous>, transform_indices = @transform_5, window_bounds = array<i64: 128, 128>}, {pipeline_mode = #tpu.pipeline_mode<synchronous>, transform_indices = @transform_6, window_bounds = array<i64: 1, 128>}, {transform_indices = @transform_7, window_bounds = array<i64: 8, 128>}, {transform_indices = @transform_8, window_bounds = array<i64: 8, 128>}]} {
    %c0 = arith.constant 0 : index
    %c0_0 = arith.constant 0 : index
    %0 = vector.load %arg1[%c0, %c0_0] : memref<8x128xf32, #tpu.memory_space<vmem>>, vector<8x128xf32>
    %c0_1 = arith.constant 0 : index
    %c0_2 = arith.constant 0 : index
    %1 = vector.load %arg2[%c0_1, %c0_2] : memref<128x512xf32, #tpu.memory_space<vmem>>, vector<128x512xf32>
    %cst = arith.constant dense<0.000000e+00> : vector<8x512xf32>
    %2 = tpu.matmul %0, %1, %cst {dimension_numbers = #tpu.dot_dimension_numbers<[1], [0], [0], [1], [0, 0, 1, 1], [], []>} : vector<8x128xf32>, vector<128x512xf32>, vector<8x512xf32> -> vector<8x512xf32>
    %c0_3 = arith.constant 0 : index
    %c0_4 = arith.constant 0 : index
    %3 = vector.load %arg3[%c0_3, %c0_4] : memref<1x512xf32, #tpu.memory_space<vmem>>, vector<1x512xf32>
    %4 = vector.broadcast %3 : vector<1x512xf32> to vector<8x512xf32>
    %5 = arith.addf %2, %4 : vector<8x512xf32>
    %6 = vector.extract_strided_slice %5 {offsets = [0, 0], sizes = [8, 128], strides = [1, 1]} : vector<8x512xf32> to vector<8x128xf32>
    %7 = vector.extract_strided_slice %5 {offsets = [0, 128], sizes = [8, 128], strides = [1, 1]} : vector<8x512xf32> to vector<8x128xf32>
    %8 = arith.maximumf %6, %7 : vector<8x128xf32>
    %9 = vector.extract_strided_slice %5 {offsets = [0, 256], sizes = [8, 128], strides = [1, 1]} : vector<8x512xf32> to vector<8x128xf32>
    %10 = arith.maximumf %8, %9 : vector<8x128xf32>
    %11 = vector.extract_strided_slice %5 {offsets = [0, 384], sizes = [8, 128], strides = [1, 1]} : vector<8x512xf32> to vector<8x128xf32>
    %12 = arith.maximumf %10, %11 : vector<8x128xf32>
    %c0_5 = arith.constant 0 : index
    %c0_6 = arith.constant 0 : index
    %13 = vector.load %arg4[%c0_5, %c0_6] : memref<128x512xf32, #tpu.memory_space<vmem>>, vector<128x512xf32>
    %cst_7 = arith.constant dense<0.000000e+00> : vector<8x512xf32>
    %14 = tpu.matmul %12, %13, %cst_7 {dimension_numbers = #tpu.dot_dimension_numbers<[1], [0], [0], [1], [0, 0, 1, 1], [], []>} : vector<8x128xf32>, vector<128x512xf32>, vector<8x512xf32> -> vector<8x512xf32>
    %c0_8 = arith.constant 0 : index
    %c0_9 = arith.constant 0 : index
    %15 = vector.load %arg5[%c0_8, %c0_9] : memref<1x512xf32, #tpu.memory_space<vmem>>, vector<1x512xf32>
    %16 = vector.broadcast %15 : vector<1x512xf32> to vector<8x512xf32>
    %17 = arith.addf %14, %16 : vector<8x512xf32>
    %18 = vector.extract_strided_slice %17 {offsets = [0, 0], sizes = [8, 128], strides = [1, 1]} : vector<8x512xf32> to vector<8x128xf32>
    %19 = vector.extract_strided_slice %17 {offsets = [0, 128], sizes = [8, 128], strides = [1, 1]} : vector<8x512xf32> to vector<8x128xf32>
    %20 = arith.maximumf %18, %19 : vector<8x128xf32>
    %21 = vector.extract_strided_slice %17 {offsets = [0, 256], sizes = [8, 128], strides = [1, 1]} : vector<8x512xf32> to vector<8x128xf32>
    %22 = arith.maximumf %20, %21 : vector<8x128xf32>
    %23 = vector.extract_strided_slice %17 {offsets = [0, 384], sizes = [8, 128], strides = [1, 1]} : vector<8x512xf32> to vector<8x128xf32>
    %24 = arith.maximumf %22, %23 : vector<8x128xf32>
    %c0_10 = arith.constant 0 : index
    %c0_11 = arith.constant 0 : index
    %25 = vector.load %arg6[%c0_10, %c0_11] : memref<128x128xf32, #tpu.memory_space<vmem>>, vector<128x128xf32>
    %cst_12 = arith.constant dense<0.000000e+00> : vector<8x128xf32>
    %26 = tpu.matmul %24, %25, %cst_12 {dimension_numbers = #tpu.dot_dimension_numbers<[1], [0], [0], [1], [0, 0, 1, 1], [], []>} : vector<8x128xf32>, vector<128x128xf32>, vector<8x128xf32> -> vector<8x128xf32>
    %c0_13 = arith.constant 0 : index
    %c0_14 = arith.constant 0 : index
    %27 = vector.load %arg7[%c0_13, %c0_14] : memref<1x128xf32, #tpu.memory_space<vmem>>, vector<1x128xf32>
    %28 = vector.broadcast %27 : vector<1x128xf32> to vector<8x128xf32>
    %29 = arith.addf %26, %28 : vector<8x128xf32>
    %c0_15 = arith.constant 0 : index
    %c0_16 = arith.constant 0 : index
    %30 = vector.load %arg8[%c0_15, %c0_16] : memref<8x128xf32, #tpu.memory_space<vmem>>, vector<8x128xf32>
    tpu.vector_store %arg8[%c0_15, %c0_16], %29 {strides = array<i32>} : memref<8x128xf32, #tpu.memory_space<vmem>>, vector<8x128xf32>,
    %c0_17 = arith.constant 0 : index
    %c0_18 = arith.constant 0 : index
    %31 = vector.load %arg9[%c0_17, %c0_18] : memref<8x128xf32, #tpu.memory_space<vmem>>, vector<8x128xf32>
    tpu.vector_store %arg9[%c0_17, %c0_18], %24 {strides = array<i32>} : memref<8x128xf32, #tpu.memory_space<vmem>>, vector<8x128xf32>,
    return
  }
  func.func @transform_0(%arg0: i32) -> (i32, i32) {
    %c0_i32 = arith.constant 0 : i32
    %c0_i32_0 = arith.constant 0 : i32
    return %arg0, %c0_i32 : i32, i32
  }
  func.func @transform_1(%arg0: i32) -> (i32, i32) {
    %c0_i32 = arith.constant 0 : i32
    %c0_i32_0 = arith.constant 0 : i32
    %c0_i32_1 = arith.constant 0 : i32
    return %c0_i32, %c0_i32_0 : i32, i32
  }
  func.func @transform_2(%arg0: i32) -> (i32, i32) {
    %c0_i32 = arith.constant 0 : i32
    %c0_i32_0 = arith.constant 0 : i32
    %c0_i32_1 = arith.constant 0 : i32
    return %c0_i32, %c0_i32_0 : i32, i32
  }
  func.func @transform_3(%arg0: i32) -> (i32, i32) {
    %c0_i32 = arith.constant 0 : i32
    %c0_i32_0 = arith.constant 0 : i32
    %c0_i32_1 = arith.constant 0 : i32
    return %c0_i32, %c0_i32_0 : i32, i32
  }
  func.func @transform_4(%arg0: i32) -> (i32, i32) {
    %c0_i32 = arith.constant 0 : i32
    %c0_i32_0 = arith.constant 0 : i32
    %c0_i32_1 = arith.constant 0 : i32
    return %c0_i32, %c0_i32_0 : i32, i32
  }
  func.func @transform_5(%arg0: i32) -> (i32, i32) {
    %c0_i32 = arith.constant 0 : i32
    %c0_i32_0 = arith.constant 0 : i32
    %c0_i32_1 = arith.constant 0 : i32
    return %c0_i32, %c0_i32_0 : i32, i32
  }
  func.func @transform_6(%arg0: i32) -> (i32, i32) {
    %c0_i32 = arith.constant 0 : i32
    %c0_i32_0 = arith.constant 0 : i32
    %c0_i32_1 = arith.constant 0 : i32
    return %c0_i32, %c0_i32_0 : i32, i32
  }
  func.func @transform_7(%arg0: i32) -> (i32, i32) {
    %c0_i32 = arith.constant 0 : i32
    %c0_i32_0 = arith.constant 0 : i32
    return %arg0, %c0_i32 : i32, i32
  }
  func.func @transform_8(%arg0: i32) -> (i32, i32) {
    %c0_i32 = arith.constant 0 : i32
    %c0_i32_0 = arith.constant 0 : i32
    return %arg0, %c0_i32 : i32, i32
  }
}

</mosaic_0001>

<llo_original>
// kernel: tpu_custom_call.1
$region0: #{tpu_custom_call.1}
  #allocation0 [shape = 'u32[]', space=smem, size = 0x4, offset = 0x4, fixed_abs, tag = 'smem constant byte address 0x4 - core index']
  #allocation1 [shape = 'u32[144,128]{1,0:T(1,128)}', space=vmem, size = 0x12000, scoped, tag = 'internal scratch']
  %s0 = inlined_call_operand.hbm [shape: f32[8,128], index: 0, kind: input, shape index: {}]
  %s1 = inlined_call_operand.hbm [shape: f32[128,512], index: 1, kind: input, shape index: {}]
  %s2 = inlined_call_operand.vmem [shape: f32[1,512], index: 2, kind: input, shape index: {}]
  %s3 = inlined_call_operand.hbm [shape: f32[128,512], index: 3, kind: input, shape index: {}]
  %s4 = inlined_call_operand.vmem [shape: f32[1,512], index: 4, kind: input, shape index: {}]
  %s5 = inlined_call_operand.hbm [shape: f32[128,128], index: 5, kind: input, shape index: {}]
  %s6 = inlined_call_operand.vmem [shape: f32[1,128], index: 6, kind: input, shape index: {}]
  %s7 = inlined_call_operand.hbm [shape: f32[8,128], index: 7, kind: output, shape index: {0}]
  %s8 = inlined_call_operand.hbm [shape: f32[8,128], index: 8, kind: output, shape index: {1}]
  %9 = xla_tuple %s7, %s8
  %s10 = sld [smem:[#allocation0]]
  $region62: #{tpu_custom_call.1} parent=0
    _
  %s12 = ssub.s32 1, %s10
  %s13 = scalar_select 0, %s12, %s10
  $region1: #{tpu_custom_call.1} parent=0
    #allocation2 [shape = 'u8[4096]{0}', space=vmem, size = 0x1000, scoped, tag = 'input window, operand 0, single buffered']
    #allocation3 [shape = 's32[1]{0}', space=sflag, size = 0x4, scoped, tag = 'scoped memory for tpu_custom_call.1']
    #allocation4 [shape = 's32[1]{0}', space=sflag, size = 0x4, scoped, tag = 'scoped memory for tpu_custom_call.1']
    #allocation5 [shape = 'u8[262144]{0}', space=vmem, size = 0x40000, scoped, tag = 'input window, operand 1, single buffered']
    #allocation6 [shape = 's32[1]{0}', space=sflag, size = 0x4, scoped, tag = 'scoped memory for tpu_custom_call.1']
    #allocation7 [shape = 'u8[262144]{0}', space=vmem, size = 0x40000, scoped, tag = 'input window, operand 3, single buffered']
    #allocation8 [shape = 'u8[65536]{0}', space=vmem, size = 0x10000, scoped, tag = 'input window, operand 5, single buffered']
    #allocation9 [shape = 's32[1]{0}', space=sflag, size = 0x4, scoped, tag = 'scoped memory for tpu_custom_call.1']
    #allocation10 [shape = 'u8[4096]{0}', space=vmem, size = 0x1000, scoped, tag = 'output window, operand 0, single buffered']
    #allocation11 [shape = 'u8[4096]{0}', space=vmem, size = 0x1000, scoped, tag = 'output window, operand 1, single buffered']
    #allocation12 [shape = 's32[1]{0}', space=sflag, size = 0x4, scoped, tag = 'scoped memory for tpu_custom_call.1']
    %14 = vsyncpa [#allocation3], 0
    %15 = vsyncpa [#allocation6], 0
    %16 = vsyncpa [#allocation9], 0
    %17 = vsyncpa [#allocation4], 0
    %18 = vsyncpa [#allocation12], 0
    // Predicated region
    $region2: #{tpu_custom_call.1} parent=1 // pred_check
      _
    $region3: #{tpu_custom_call.1} parent=1 // pred_check_branch
      %20 = sbr.rel (0) target = $region5
    $region4: #{tpu_custom_call.1} parent=1 // pred_region
      %s22 = ssub.s32 128, 128
      %23 = vsyncadd [#allocation3], %s22
      %s25 = sshll.u32 [#allocation2], 4
      %s26 = int_to_ptr.vmem [resolvable:$true] %s25
      %28 = dma.hbm_to_vmem [thread:$0]  %s0, 128, %s26, [#allocation3]
    $region5: #{tpu_custom_call.1} parent=1 // pred_fallthru
      _
    // Predicated region
    $region6: #{tpu_custom_call.1} parent=1 // pred_check
      _
    $region7: #{tpu_custom_call.1} parent=1 // pred_check_branch
      %30 = sbr.rel (0) target = $region9
    $region8: #{tpu_custom_call.1} parent=1 // pred_region
      %s32 = ssub.s32 8192, 8192
      %33 = vsyncadd [#allocation6], %s32
      %s34 = sshll.u32 [#allocation5], 4
      %s35 = int_to_ptr.vmem [resolvable:$true] %s34
      %40 = dma.hbm_to_vmem [thread:$0]  %s1, 8192, %s35, [#allocation6], 512, 512, 32
    $region9: #{tpu_custom_call.1} parent=1 // pred_fallthru
      _
    // Predicated region
    $region10: #{tpu_custom_call.1} parent=1 // pred_check
      _
    $region11: #{tpu_custom_call.1} parent=1 // pred_check_branch
      %42 = sbr.rel (0) target = $region13
    $region12: #{tpu_custom_call.1} parent=1 // pred_region
      _
    $region13: #{tpu_custom_call.1} parent=1 // pred_fallthru
      _
    // Predicated region
    $region14: #{tpu_custom_call.1} parent=1 // pred_check
      _
    $region15: #{tpu_custom_call.1} parent=1 // pred_check_branch
      %44 = sbr.rel (0) target = $region17
    $region16: #{tpu_custom_call.1} parent=1 // pred_region
      %s46 = ssub.s32 8192, 8192
      %47 = vsyncadd [#allocation6], %s46
      %s48 = sshll.u32 [#allocation7], 4
      %s49 = int_to_ptr.vmem [resolvable:$true] %s48
      %54 = dma.hbm_to_vmem [thread:$0]  %s3, 8192, %s49, [#allocation6], 512, 512, 32
    $region17: #{tpu_custom_call.1} parent=1 // pred_fallthru
      _
    // Predicated region
    $region18: #{tpu_custom_call.1} parent=1 // pred_check
      _
    $region19: #{tpu_custom_call.1} parent=1 // pred_check_branch
      %56 = sbr.rel (0) target = $region21
    $region20: #{tpu_custom_call.1} parent=1 // pred_region
      _
    $region21: #{tpu_custom_call.1} parent=1 // pred_fallthru
      _
    // Predicated region
    $region22: #{tpu_custom_call.1} parent=1 // pred_check
      _
    $region23: #{tpu_custom_call.1} parent=1 // pred_check_branch
      %58 = sbr.rel (0) target = $region25
    $region24: #{tpu_custom_call.1} parent=1 // pred_region
      %s60 = ssub.s32 2048, 2048
      %61 = vsyncadd [#allocation9], %s60
      %s62 = sshll.u32 [#allocation8], 4
      %s63 = int_to_ptr.vmem [resolvable:$true] %s62
      %68 = dma.hbm_to_vmem [thread:$0]  %s5, 2048, %s63, [#allocation9], 128, 128, 8
    $region25: #{tpu_custom_call.1} parent=1 // pred_fallthru
      _
    // Predicated region
    $region26: #{tpu_custom_call.1} parent=1 // pred_check
      _
    $region27: #{tpu_custom_call.1} parent=1 // pred_check_branch
      %70 = sbr.rel (0) target = $region29
    $region28: #{tpu_custom_call.1} parent=1 // pred_region
      _
    $region29: #{tpu_custom_call.1} parent=1 // pred_fallthru
      _
    // Predicated region
    $region30: #{tpu_custom_call.1} parent=1 // pred_check
      _
    $region31: #{tpu_custom_call.1} parent=1 // pred_check_branch
      %72 = sbr.rel (0) target = $region33
    $region32: #{tpu_custom_call.1} parent=1 // pred_region
      %73 = dma.done [#allocation3], 128
    $region33: #{tpu_custom_call.1} parent=1 // pred_fallthru
      _
    // Predicated region
    $region34: #{tpu_custom_call.1} parent=1 // pred_check
      _
    $region35: #{tpu_custom_call.1} parent=1 // pred_check_branch
      %75 = sbr.rel (0) target = $region37
    $region36: #{tpu_custom_call.1} parent=1 // pred_region
      %76 = dma.done [#allocation6], 8192
    $region37: #{tpu_custom_call.1} parent=1 // pred_fallthru
      _
    // Predicated region
    $region38: #{tpu_custom_call.1} parent=1 // pred_check
      _
    $region39: #{tpu_custom_call.1} parent=1 // pred_check_branch
      %78 = sbr.rel (0) target = $region41
    $region40: #{tpu_custom_call.1} parent=1 // pred_region
      %79 = dma.done [#allocation6], 8192
    $region41: #{tpu_custom_call.1} parent=1 // pred_fallthru
      _
    // Predicated region
    $region42: #{tpu_custom_call.1} parent=1 // pred_check
      _
    $region43: #{tpu_custom_call.1} parent=1 // pred_check_branch
      %81 = sbr.rel (0) target = $region45
    $region44: #{tpu_custom_call.1} parent=1 // pred_region
      %82 = dma.done [#allocation9], 2048
    $region45: #{tpu_custom_call.1} parent=1 // pred_fallthru
      _
    %v83 = vld [vmem:[#allocation2] sm:$0xff]
    %v84 = vld [vmem:[#allocation5] sm:$0xff]
    %v85 = vld [vmem:[#allocation5 + $0x8] sm:$0xff]
    %v86 = vld [vmem:[#allocation5 + $0x10] sm:$0xff]
    %v87 = vld [vmem:[#allocation5 + $0x18] sm:$0xff]
    %v88 = vld [vmem:[#allocation5 + $0x20] sm:$0xff]
    %v89 = vld [vmem:[#allocation5 + $0x28] sm:$0xff]
    %v90 = vld [vmem:[#allocation5 + $0x30] sm:$0xff]
    %v91 = vld [vmem:[#allocation5 + $0x38] sm:$0xff]
    %v92 = vld [vmem:[#allocation5 + $0x40] sm:$0xff]
    %v93 = vld [vmem:[#allocation5 + $0x48] sm:$0xff]
    %v94 = vld [vmem:[#allocation5 + $0x50] sm:$0xff]
    %v95 = vld [vmem:[#allocation5 + $0x58] sm:$0xff]
    %v96 = vld [vmem:[#allocation5 + $0x60] sm:$0xff]
    %v97 = vld [vmem:[#allocation5 + $0x68] sm:$0xff]
    %v98 = vld [vmem:[#allocation5 + $0x70] sm:$0xff]
    %v99 = vld [vmem:[#allocation5 + $0x78] sm:$0xff]
    %v100 = vld [vmem:[#allocation5 + $0x80] sm:$0xff]
    %v101 = vld [vmem:[#allocation5 + $0x88] sm:$0xff]
    %v102 = vld [vmem:[#allocation5 + $0x90] sm:$0xff]
    %v103 = vld [vmem:[#allocation5 + $0x98] sm:$0xff]
    %v104 = vld [vmem:[#allocation5 + $0xa0] sm:$0xff]
    %v105 = vld [vmem:[#allocation5 + $0xa8] sm:$0xff]
    %v106 = vld [vmem:[#allocation5 + $0xb0] sm:$0xff]
    %v107 = vld [vmem:[#allocation5 + $0xb8] sm:$0xff]
    %v108 = vld [vmem:[#allocation5 + $0xc0] sm:$0xff]
    %v109 = vld [vmem:[#allocation5 + $0xc8] sm:$0xff]
    %v110 = vld [vmem:[#allocation5 + $0xd0] sm:$0xff]
    %v111 = vld [vmem:[#allocation5 + $0xd8] sm:$0xff]
    %v112 = vld [vmem:[#allocation5 + $0xe0] sm:$0xff]
    %v113 = vld [vmem:[#allocation5 + $0xe8] sm:$0xff]
    %v114 = vld [vmem:[#allocation5 + $0xf0] sm:$0xff]
    %v115 = vld [vmem:[#allocation5 + $0xf8] sm:$0xff]
    %v116 = vld [vmem:[#allocation5 + $0x100] sm:$0xff]
    %v117 = vld [vmem:[#allocation5 + $0x108] sm:$0xff]
    %v118 = vld [vmem:[#allocation5 + $0x110] sm:$0xff]
    %v119 = vld [vmem:[#allocation5 + $0x118] sm:$0xff]
    %v120 = vld [vmem:[#allocation5 + $0x120] sm:$0xff]
    %v121 = vld [vmem:[#allocation5 + $0x128] sm:$0xff]
    %v122 = vld [vmem:[#allocation5 + $0x130] sm:$0xff]
    %v123 = vld [vmem:[#allocation5 + $0x138] sm:$0xff]
    %v124 = vld [vmem:[#allocation5 + $0x140] sm:$0xff]
    %v125 = vld [vmem:[#allocation5 + $0x148] sm:$0xff]
    %v126 = vld [vmem:[#allocation5 + $0x150] sm:$0xff]
    %v127 = vld [vmem:[#allocation5 + $0x158] sm:$0xff]
    %v128 = vld [vmem:[#allocation5 + $0x160] sm:$0xff]
    %v129 = vld [vmem:[#allocation5 + $0x168] sm:$0xff]
    %v130 = vld [vmem:[#allocation5 + $0x170] sm:$0xff]
    %v131 = vld [vmem:[#allocation5 + $0x178] sm:$0xff]
    %v132 = vld [vmem:[#allocation5 + $0x180] sm:$0xff]
    %v133 = vld [vmem:[#allocation5 + $0x188] sm:$0xff]
    %v134 = vld [vmem:[#allocation5 + $0x190] sm:$0xff]
    %v135 = vld [vmem:[#allocation5 + $0x198] sm:$0xff]
    %v136 = vld [vmem:[#allocation5 + $0x1a0] sm:$0xff]
    %v137 = vld [vmem:[#allocation5 + $0x1a8] sm:$0xff]
    %v138 = vld [vmem:[#allocation5 + $0x1b0] sm:$0xff]
    %v139 = vld [vmem:[#allocation5 + $0x1b8] sm:$0xff]
    %v140 = vld [vmem:[#allocation5 + $0x1c0] sm:$0xff]
    %v141 = vld [vmem:[#allocation5 + $0x1c8] sm:$0xff]
    %v142 = vld [vmem:[#allocation5 + $0x1d0] sm:$0xff]
    %v143 = vld [vmem:[#allocation5 + $0x1d8] sm:$0xff]
    %v144 = vld [vmem:[#allocation5 + $0x1e0] sm:$0xff]
    %v145 = vld [vmem:[#allocation5 + $0x1e8] sm:$0xff]
    %v146 = vld [vmem:[#allocation5 + $0x1f0] sm:$0xff]
    %v147 = vld [vmem:[#allocation5 + $0x1f8] sm:$0xff]
    %v148 = vld [vmem:[%s2] sm:$0xf]
    %v150 = vlaneseq
    %v151 = vshrl.u32 %v150, 7
    %v152 = vsub.s32 0, %v151
    %v153 = vrot.slane %v148, %v152
    %v154 = vlaneseq
    %v155 = vshrl.u32 %v154, 7
    %v156 = vsub.s32 1, %v155
    %v157 = vrot.slane %v148, %v156
    %v158 = vlaneseq
    %v159 = vshrl.u32 %v158, 7
    %v160 = vsub.s32 2, %v159
    %v161 = vrot.slane %v148, %v160
    %v162 = vlaneseq
    %v163 = vshrl.u32 %v162, 7
    %v164 = vsub.s32 3, %v163
    %v165 = vrot.slane %v148, %v164
    %170 = vmatprep.subr.mxu0 %v85
    %171 = vmatpush1.msra.mxu0 %v84
    %172 = vmatprep.subr.mxu0 %v89
    %173 = vmatpush1.msra.mxu0 %v88
    %174 = vmatprep.subr.mxu0 %v93
    %175 = vmatpush1.msra.mxu0 %v92
    %176 = vmatprep.subr.mxu0 %v97
    %177 = vmatpush1.msra.mxu0 %v96
    %178 = vmatprep.subr.mxu0 %v101
    %179 = vmatpush1.msra.mxu0 %v100
    %180 = vmatprep.subr.mxu0 %v105
    %181 = vmatpush1.msra.mxu0 %v104
    %182 = vmatprep.subr.mxu0 %v109
    %183 = vmatpush1.msra.mxu0 %v108
    %184 = vmatprep.subr.mxu0 %v113
    %185 = vmatpush1.msra.mxu0 %v112
    %186 = vmatprep.subr.mxu0 %v117
    %187 = vmatpush1.msra.mxu0 %v116
    %188 = vmatprep.subr.mxu0 %v121
    %189 = vmatpush1.msra.mxu0 %v120
    %190 = vmatprep.subr.mxu0 %v125
    %191 = vmatpush1.msra.mxu0 %v124
    %192 = vmatprep.subr.mxu0 %v129
    %193 = vmatpush1.msra.mxu0 %v128
    %194 = vmatprep.subr.mxu0 %v133
    %195 = vmatpush1.msra.mxu0 %v132
    %196 = vmatprep.subr.mxu0 %v137
    %197 = vmatpush1.msra.mxu0 %v136
    %198 = vmatprep.subr.mxu0 %v141
    %199 = vmatpush1.msra.mxu0 %v140
    %200 = vmatprep.subr.mxu0 %v145
    %201 = vmatpush1.msra.mxu0 %v144
    %202 = vmatprep.subr.mxu0 0.0
    %203 = vmatpush1.msra.mxu0 0.0
    %204 = vmatprep.subr.mxu0 0.0
    %205 = vmatpush1.msra.mxu0 0.0
    %206 = vmatprep.subr.mxu0 0.0
    %207 = vmatpush1.msra.mxu0 0.0
    %208 = vmatprep.subr.mxu0 0.0
    %209 = vmatpush1.msra.mxu0 0.0
    %210 = vmatprep.subr.mxu0 0.0
    %211 = vmatpush1.msra.mxu0 0.0
    %212 = vmatprep.subr.mxu0 0.0
    %213 = vmatpush1.msra.mxu0 0.0
    %214 = vmatprep.subr.mxu0 0.0
    %215 = vmatpush1.msra.mxu0 0.0
    %216 = vmatprep.subr.mxu0 0.0
    %217 = vmatpush1.msra.mxu0 0.0
    %218 = vmatprep.subr.mxu0 0.0
    %219 = vmatpush1.msra.mxu0 0.0
    %220 = vmatprep.subr.mxu0 0.0
    %221 = vmatpush1.msra.mxu0 0.0
    %222 = vmatprep.subr.mxu0 0.0
    %223 = vmatpush1.msra.mxu0 0.0
    %224 = vmatprep.subr.mxu0 0.0
    %225 = vmatpush1.msra.mxu0 0.0
    %226 = vmatprep.subr.mxu0 0.0
    %227 = vmatpush1.msra.mxu0 0.0
    %228 = vmatprep.subr.mxu0 0.0
    %229 = vmatpush1.msra.mxu0 0.0
    %230 = vmatprep.subr.mxu0 0.0
    %231 = vmatpush1.msra.mxu0 0.0
    %232 = vmatprep.subr.mxu0 0.0
    %233 = vmatpush1.msra.mxu0 0.0
    %234 = vmatprep.mubr.f32.mxu0 0.0
    %235 = vmatmul.mubr.f32.gmra.mrb[0].mxu0 %v83
    %v236 = vpop.f32.mrb[0].mxu0
    %v237 = vadd.f32 %v153, %v236
    %v238 = vpop.f32.mrb[0].mxu0
    %v239 = vadd.f32 %v157, %v238
    %240 = vdwg.mxu0
    %241 = vmatprep.subr.mxu0 %v87
    %242 = vmatpush1.msra.mxu0 %v86
    %243 = vmatprep.subr.mxu0 %v91
    %244 = vmatpush1.msra.mxu0 %v90
    %245 = vmatprep.subr.mxu0 %v95
    %246 = vmatpush1.msra.mxu0 %v94
    %247 = vmatprep.subr.mxu0 %v99
    %248 = vmatpush1.msra.mxu0 %v98
    %249 = vmatprep.subr.mxu0 %v103
    %250 = vmatpush1.msra.mxu0 %v102
    %251 = vmatprep.subr.mxu0 %v107
    %252 = vmatpush1.msra.mxu0 %v106
    %253 = vmatprep.subr.mxu0 %v111
    %254 = vmatpush1.msra.mxu0 %v110
    %255 = vmatprep.subr.mxu0 %v115
    %256 = vmatpush1.msra.mxu0 %v114
    %257 = vmatprep.subr.mxu0 %v119
    %258 = vmatpush1.msra.mxu0 %v118
    %259 = vmatprep.subr.mxu0 %v123
    %260 = vmatpush1.msra.mxu0 %v122
    %261 = vmatprep.subr.mxu0 %v127
    %262 = vmatpush1.msra.mxu0 %v126
    %263 = vmatprep.subr.mxu0 %v131
    %264 = vmatpush1.msra.mxu0 %v130
    %265 = vmatprep.subr.mxu0 %v135
    %266 = vmatpush1.msra.mxu0 %v134
    %267 = vmatprep.subr.mxu0 %v139
    %268 = vmatpush1.msra.mxu0 %v138
    %269 = vmatprep.subr.mxu0 %v143
    %270 = vmatpush1.msra.mxu0 %v142
    %271 = vmatprep.subr.mxu0 %v147
    %272 = vmatpush1.msra.mxu0 %v146
    %273 = vmatprep.subr.mxu0 0.0
    %274 = vmatpush1.msra.mxu0 0.0
    %275 = vmatprep.subr.mxu0 0.0
    %276 = vmatpush1.msra.mxu0 0.0
    %277 = vmatprep.subr.mxu0 0.0
    %278 = vmatpush1.msra.mxu0 0.0
    %279 = vmatprep.subr.mxu0 0.0
    %280 = vmatpush1.msra.mxu0 0.0
    %281 = vmatprep.subr.mxu0 0.0
    %282 = vmatpush1.msra.mxu0 0.0
    %283 = vmatprep.subr.mxu0 0.0
    %284 = vmatpush1.msra.mxu0 0.0
    %285 = vmatprep.subr.mxu0 0.0
    %286 = vmatpush1.msra.mxu0 0.0
    %287 = vmatprep.subr.mxu0 0.0
    %288 = vmatpush1.msra.mxu0 0.0
    %289 = vmatprep.subr.mxu0 0.0
    %290 = vmatpush1.msra.mxu0 0.0
    %291 = vmatprep.subr.mxu0 0.0
    %292 = vmatpush1.msra.mxu0 0.0
    %293 = vmatprep.subr.mxu0 0.0
    %294 = vmatpush1.msra.mxu0 0.0
    %295 = vmatprep.subr.mxu0 0.0
    %296 = vmatpush1.msra.mxu0 0.0
    %297 = vmatprep.subr.mxu0 0.0
    %298 = vmatpush1.msra.mxu0 0.0
    %299 = vmatprep.subr.mxu0 0.0
    %300 = vmatpush1.msra.mxu0 0.0
    %301 = vmatprep.subr.mxu0 0.0
    %302 = vmatpush1.msra.mxu0 0.0
    %303 = vmatprep.subr.mxu0 0.0
    %304 = vmatpush1.msra.mxu0 0.0
    %305 = vmatprep.mubr.f32.mxu0 0.0
    %306 = vmatmul.mubr.f32.gmra.mrb[0].mxu0 %v83
    %v307 = vpop.f32.mrb[0].mxu0
    %v308 = vadd.f32 %v161, %v307
    %v309 = vpop.f32.mrb[0].mxu0
    %v310 = vadd.f32 %v165, %v309
    %311 = vdwg.mxu0
    %v312 = vmax.f32 %v237, %v239
    %v313 = vmax.f32 %v312, %v308
    %v314 = vmax.f32 %v313, %v310
    %v315 = vld [vmem:[#allocation7] sm:$0xff]
    %v316 = vld [vmem:[#allocation7 + $0x8] sm:$0xff]
    %v317 = vld [vmem:[#allocation7 + $0x10] sm:$0xff]
    %v318 = vld [vmem:[#allocation7 + $0x18] sm:$0xff]
    %v319 = vld [vmem:[#allocation7 + $0x20] sm:$0xff]
    %v320 = vld [vmem:[#allocation7 + $0x28] sm:$0xff]
    %v321 = vld [vmem:[#allocation7 + $0x30] sm:$0xff]
    %v322 = vld [vmem:[#allocation7 + $0x38] sm:$0xff]
    %v323 = vld [vmem:[#allocation7 + $0x40] sm:$0xff]
    %v324 = vld [vmem:[#allocation7 + $0x48] sm:$0xff]
    %v325 = vld [vmem:[#allocation7 + $0x50] sm:$0xff]
    %v326 = vld [vmem:[#allocation7 + $0x58] sm:$0xff]
    %v327 = vld [vmem:[#allocation7 + $0x60] sm:$0xff]
    %v328 = vld [vmem:[#allocation7 + $0x68] sm:$0xff]
    %v329 = vld [vmem:[#allocation7 + $0x70] sm:$0xff]
    %v330 = vld [vmem:[#allocation7 + $0x78] sm:$0xff]
    %v331 = vld [vmem:[#allocation7 + $0x80] sm:$0xff]
    %v332 = vld [vmem:[#allocation7 + $0x88] sm:$0xff]
    %v333 = vld [vmem:[#allocation7 + $0x90] sm:$0xff]
    %v334 = vld [vmem:[#allocation7 + $0x98] sm:$0xff]
    %v335 = vld [vmem:[#allocation7 + $0xa0] sm:$0xff]
    %v336 = vld [vmem:[#allocation7 + $0xa8] sm:$0xff]
    %v337 = vld [vmem:[#allocation7 + $0xb0] sm:$0xff]
    %v338 = vld [vmem:[#allocation7 + $0xb8] sm:$0xff]
    %v339 = vld [vmem:[#allocation7 + $0xc0] sm:$0xff]
    %v340 = vld [vmem:[#allocation7 + $0xc8] sm:$0xff]
    %v341 = vld [vmem:[#allocation7 + $0xd0] sm:$0xff]
    %v342 = vld [vmem:[#allocation7 + $0xd8] sm:$0xff]
    %v343 = vld [vmem:[#allocation7 + $0xe0] sm:$0xff]
    %v344 = vld [vmem:[#allocation7 + $0xe8] sm:$0xff]
    %v345 = vld [vmem:[#allocation7 + $0xf0] sm:$0xff]
    %v346 = vld [vmem:[#allocation7 + $0xf8] sm:$0xff]
    %v347 = vld [vmem:[#allocation7 + $0x100] sm:$0xff]
    %v348 = vld [vmem:[#allocation7 + $0x108] sm:$0xff]
    %v349 = vld [vmem:[#allocation7 + $0x110] sm:$0xff]
    %v350 = vld [vmem:[#allocation7 + $0x118] sm:$0xff]
    %v351 = vld [vmem:[#allocation7 + $0x120] sm:$0xff]
    %v352 = vld [vmem:[#allocation7 + $0x128] sm:$0xff]
    %v353 = vld [vmem:[#allocation7 + $0x130] sm:$0xff]
    %v354 = vld [vmem:[#allocation7 + $0x138] sm:$0xff]
    %v355 = vld [vmem:[#allocation7 + $0x140] sm:$0xff]
    %v356 = vld [vmem:[#allocation7 + $0x148] sm:$0xff]
    %v357 = vld [vmem:[#allocation7 + $0x150] sm:$0xff]
    %v358 = vld [vmem:[#allocation7 + $0x158] sm:$0xff]
    %v359 = vld [vmem:[#allocation7 + $0x160] sm:$0xff]
    %v360 = vld [vmem:[#allocation7 + $0x168] sm:$0xff]
    %v361 = vld [vmem:[#allocation7 + $0x170] sm:$0xff]
    %v362 = vld [vmem:[#allocation7 + $0x178] sm:$0xff]
    %v363 = vld [vmem:[#allocation7 + $0x180] sm:$0xff]
    %v364 = vld [vmem:[#allocation7 + $0x188] sm:$0xff]
    %v365 = vld [vmem:[#allocation7 + $0x190] sm:$0xff]
    %v366 = vld [vmem:[#allocation7 + $0x198] sm:$0xff]
    %v367 = vld [vmem:[#allocation7 + $0x1a0] sm:$0xff]
    %v368 = vld [vmem:[#allocation7 + $0x1a8] sm:$0xff]
    %v369 = vld [vmem:[#allocation7 + $0x1b0] sm:$0xff]
    %v370 = vld [vmem:[#allocation7 + $0x1b8] sm:$0xff]
    %v371 = vld [vmem:[#allocation7 + $0x1c0] sm:$0xff]
    %v372 = vld [vmem:[#allocation7 + $0x1c8] sm:$0xff]
    %v373 = vld [vmem:[#allocation7 + $0x1d0] sm:$0xff]
    %v374 = vld [vmem:[#allocation7 + $0x1d8] sm:$0xff]
    %v375 = vld [vmem:[#allocation7 + $0x1e0] sm:$0xff]
    %v376 = vld [vmem:[#allocation7 + $0x1e8] sm:$0xff]
    %v377 = vld [vmem:[#allocation7 + $0x1f0] sm:$0xff]
    %v378 = vld [vmem:[#allocation7 + $0x1f8] sm:$0xff]
    %v379 = vld [vmem:[%s4] sm:$0xf]
    %v381 = vlaneseq
    %v382 = vshrl.u32 %v381, 7
    %v383 = vsub.s32 0, %v382
    %v384 = vrot.slane %v379, %v383
    %v385 = vlaneseq
    %v386 = vshrl.u32 %v385, 7
    %v387 = vsub.s32 1, %v386
    %v388 = vrot.slane %v379, %v387
    %v389 = vlaneseq
    %v390 = vshrl.u32 %v389, 7
    %v391 = vsub.s32 2, %v390
    %v392 = vrot.slane %v379, %v391
    %v393 = vlaneseq
    %v394 = vshrl.u32 %v393, 7
    %v395 = vsub.s32 3, %v394
    %v396 = vrot.slane %v379, %v395
    %401 = vmatprep.subr.mxu0 %v316
    %402 = vmatpush1.msra.mxu0 %v315
    %403 = vmatprep.subr.mxu0 %v320
    %404 = vmatpush1.msra.mxu0 %v319
    %405 = vmatprep.subr.mxu0 %v324
    %406 = vmatpush1.msra.mxu0 %v323
    %407 = vmatprep.subr.mxu0 %v328
    %408 = vmatpush1.msra.mxu0 %v327
    %409 = vmatprep.subr.mxu0 %v332
    %410 = vmatpush1.msra.mxu0 %v331
    %411 = vmatprep.subr.mxu0 %v336
    %412 = vmatpush1.msra.mxu0 %v335
    %413 = vmatprep.subr.mxu0 %v340
    %414 = vmatpush1.msra.mxu0 %v339
    %415 = vmatprep.subr.mxu0 %v344
    %416 = vmatpush1.msra.mxu0 %v343
    %417 = vmatprep.subr.mxu0 %v348
    %418 = vmatpush1.msra.mxu0 %v347
    %419 = vmatprep.subr.mxu0 %v352
    %420 = vmatpush1.msra.mxu0 %v351
    %421 = vmatprep.subr.mxu0 %v356
    %422 = vmatpush1.msra.mxu0 %v355
    %423 = vmatprep.subr.mxu0 %v360
    %424 = vmatpush1.msra.mxu0 %v359
    %425 = vmatprep.subr.mxu0 %v364
    %426 = vmatpush1.msra.mxu0 %v363
    %427 = vmatprep.subr.mxu0 %v368
    %428 = vmatpush1.msra.mxu0 %v367
    %429 = vmatprep.subr.mxu0 %v372
    %430 = vmatpush1.msra.mxu0 %v371
    %431 = vmatprep.subr.mxu0 %v376
    %432 = vmatpush1.msra.mxu0 %v375
    %433 = vmatprep.subr.mxu0 0.0
    %434 = vmatpush1.msra.mxu0 0.0
    %435 = vmatprep.subr.mxu0 0.0
    %436 = vmatpush1.msra.mxu0 0.0
    %437 = vmatprep.subr.mxu0 0.0
    %438 = vmatpush1.msra.mxu0 0.0
    %439 = vmatprep.subr.mxu0 0.0
    %440 = vmatpush1.msra.mxu0 0.0
    %441 = vmatprep.subr.mxu0 0.0
    %442 = vmatpush1.msra.mxu0 0.0
    %443 = vmatprep.subr.mxu0 0.0
    %444 = vmatpush1.msra.mxu0 0.0
    %445 = vmatprep.subr.mxu0 0.0
    %446 = vmatpush1.msra.mxu0 0.0
    %447 = vmatprep.subr.mxu0 0.0
    %448 = vmatpush1.msra.mxu0 0.0
    %449 = vmatprep.subr.mxu0 0.0
    %450 = vmatpush1.msra.mxu0 0.0
    %451 = vmatprep.subr.mxu0 0.0
    %452 = vmatpush1.msra.mxu0 0.0
    %453 = vmatprep.subr.mxu0 0.0
    %454 = vmatpush1.msra.mxu0 0.0
    %455 = vmatprep.subr.mxu0 0.0
    %456 = vmatpush1.msra.mxu0 0.0
    %457 = vmatprep.subr.mxu0 0.0
    %458 = vmatpush1.msra.mxu0 0.0
    %459 = vmatprep.subr.mxu0 0.0
    %460 = vmatpush1.msra.mxu0 0.0
    %461 = vmatprep.subr.mxu0 0.0
    %462 = vmatpush1.msra.mxu0 0.0
    %463 = vmatprep.subr.mxu0 0.0
    %464 = vmatpush1.msra.mxu0 0.0
    %465 = vmatprep.mubr.f32.mxu0 0.0
    %466 = vmatmul.mubr.f32.gmra.mrb[0].mxu0 %v314
    %v467 = vpop.f32.mrb[0].mxu0
    %v468 = vadd.f32 %v384, %v467
    %v469 = vpop.f32.mrb[0].mxu0
    %v470 = vadd.f32 %v388, %v469
    %471 = vdwg.mxu0
    %472 = vmatprep.subr.mxu0 %v318
    %473 = vmatpush1.msra.mxu0 %v317
    %474 = vmatprep.subr.mxu0 %v322
    %475 = vmatpush1.msra.mxu0 %v321
    %476 = vmatprep.subr.mxu0 %v326
    %477 = vmatpush1.msra.mxu0 %v325
    %478 = vmatprep.subr.mxu0 %v330
    %479 = vmatpush1.msra.mxu0 %v329
    %480 = vmatprep.subr.mxu0 %v334
    %481 = vmatpush1.msra.mxu0 %v333
    %482 = vmatprep.subr.mxu0 %v338
    %483 = vmatpush1.msra.mxu0 %v337
    %484 = vmatprep.subr.mxu0 %v342
    %485 = vmatpush1.msra.mxu0 %v341
    %486 = vmatprep.subr.mxu0 %v346
    %487 = vmatpush1.msra.mxu0 %v345
    %488 = vmatprep.subr.mxu0 %v350
    %489 = vmatpush1.msra.mxu0 %v349
    %490 = vmatprep.subr.mxu0 %v354
    %491 = vmatpush1.msra.mxu0 %v353
    %492 = vmatprep.subr.mxu0 %v358
    %493 = vmatpush1.msra.mxu0 %v357
    %494 = vmatprep.subr.mxu0 %v362
    %495 = vmatpush1.msra.mxu0 %v361
    %496 = vmatprep.subr.mxu0 %v366
    %497 = vmatpush1.msra.mxu0 %v365
    %498 = vmatprep.subr.mxu0 %v370
    %499 = vmatpush1.msra.mxu0 %v369
    %500 = vmatprep.subr.mxu0 %v374
    %501 = vmatpush1.msra.mxu0 %v373
    %502 = vmatprep.subr.mxu0 %v378
    %503 = vmatpush1.msra.mxu0 %v377
    %504 = vmatprep.subr.mxu0 0.0
    %505 = vmatpush1.msra.mxu0 0.0
    %506 = vmatprep.subr.mxu0 0.0
    %507 = vmatpush1.msra.mxu0 0.0
    %508 = vmatprep.subr.mxu0 0.0
    %509 = vmatpush1.msra.mxu0 0.0
    %510 = vmatprep.subr.mxu0 0.0
    %511 = vmatpush1.msra.mxu0 0.0
    %512 = vmatprep.subr.mxu0 0.0
    %513 = vmatpush1.msra.mxu0 0.0
    %514 = vmatprep.subr.mxu0 0.0
    %515 = vmatpush1.msra.mxu0 0.0
    %516 = vmatprep.subr.mxu0 0.0
    %517 = vmatpush1.msra.mxu0 0.0
    %518 = vmatprep.subr.mxu0 0.0
    %519 = vmatpush1.msra.mxu0 0.0
    %520 = vmatprep.subr.mxu0 0.0
    %521 = vmatpush1.msra.mxu0 0.0
    %522 = vmatprep.subr.mxu0 0.0
    %523 = vmatpush1.msra.mxu0 0.0
    %524 = vmatprep.subr.mxu0 0.0
    %525 = vmatpush1.msra.mxu0 0.0
    %526 = vmatprep.subr.mxu0 0.0
    %527 = vmatpush1.msra.mxu0 0.0
    %528 = vmatprep.subr.mxu0 0.0
    %529 = vmatpush1.msra.mxu0 0.0
    %530 = vmatprep.subr.mxu0 0.0
    %531 = vmatpush1.msra.mxu0 0.0
    %532 = vmatprep.subr.mxu0 0.0
    %533 = vmatpush1.msra.mxu0 0.0
    %534 = vmatprep.subr.mxu0 0.0
    %535 = vmatpush1.msra.mxu0 0.0
    %536 = vmatprep.mubr.f32.mxu0 0.0
    %537 = vmatmul.mubr.f32.gmra.mrb[0].mxu0 %v314
    %v538 = vpop.f32.mrb[0].mxu0
    %v539 = vadd.f32 %v392, %v538
    %v540 = vpop.f32.mrb[0].mxu0
    %v541 = vadd.f32 %v396, %v540
    %542 = vdwg.mxu0
    %v543 = vmax.f32 %v468, %v470
    %v544 = vmax.f32 %v543, %v539
    %v545 = vmax.f32 %v544, %v541
    %v546 = vld [vmem:[#allocation8] sm:$0xff]
    %v547 = vld [vmem:[#allocation8 + $0x8] sm:$0xff]
    %v548 = vld [vmem:[#allocation8 + $0x10] sm:$0xff]
    %v549 = vld [vmem:[#allocation8 + $0x18] sm:$0xff]
    %v550 = vld [vmem:[#allocation8 + $0x20] sm:$0xff]
    %v551 = vld [vmem:[#allocation8 + $0x28] sm:$0xff]
    %v552 = vld [vmem:[#allocation8 + $0x30] sm:$0xff]
    %v553 = vld [vmem:[#allocation8 + $0x38] sm:$0xff]
    %v554 = vld [vmem:[#allocation8 + $0x40] sm:$0xff]
    %v555 = vld [vmem:[#allocation8 + $0x48] sm:$0xff]
    %v556 = vld [vmem:[#allocation8 + $0x50] sm:$0xff]
    %v557 = vld [vmem:[#allocation8 + $0x58] sm:$0xff]
    %v558 = vld [vmem:[#allocation8 + $0x60] sm:$0xff]
    %v559 = vld [vmem:[#allocation8 + $0x68] sm:$0xff]
    %v560 = vld [vmem:[#allocation8 + $0x70] sm:$0xff]
    %v561 = vld [vmem:[#allocation8 + $0x78] sm:$0xff]
    %v562 = vld [vmem:[%s6] sm:$0x1]
    %v564 = vlaneseq
    %v565 = vshrl.u32 %v564, 7
    %v566 = vsub.s32 0, %v565
    %v567 = vrot.slane %v562, %v566
    %569 = vmatprep.subr.mxu0 0.0
    %570 = vmatpush1.msra.mxu0 %v546
    %571 = vmatprep.subr.mxu0 0.0
    %572 = vmatpush1.msra.mxu0 %v547
    %573 = vmatprep.subr.mxu0 0.0
    %574 = vmatpush1.msra.mxu0 %v548
    %575 = vmatprep.subr.mxu0 0.0
    %576 = vmatpush1.msra.mxu0 %v549
    %577 = vmatprep.subr.mxu0 0.0
    %578 = vmatpush1.msra.mxu0 %v550
    %579 = vmatprep.subr.mxu0 0.0
    %580 = vmatpush1.msra.mxu0 %v551
    %581 = vmatprep.subr.mxu0 0.0
    %582 = vmatpush1.msra.mxu0 %v552
    %583 = vmatprep.subr.mxu0 0.0
    %584 = vmatpush1.msra.mxu0 %v553
    %585 = vmatprep.subr.mxu0 0.0
    %586 = vmatpush1.msra.mxu0 %v554
    %587 = vmatprep.subr.mxu0 0.0
    %588 = vmatpush1.msra.mxu0 %v555
    %589 = vmatprep.subr.mxu0 0.0
    %590 = vmatpush1.msra.mxu0 %v556
    %591 = vmatprep.subr.mxu0 0.0
    %592 = vmatpush1.msra.mxu0 %v557
    %593 = vmatprep.subr.mxu0 0.0
    %594 = vmatpush1.msra.mxu0 %v558
    %595 = vmatprep.subr.mxu0 0.0
    %596 = vmatpush1.msra.mxu0 %v559
    %597 = vmatprep.subr.mxu0 0.0
    %598 = vmatpush1.msra.mxu0 %v560
    %599 = vmatprep.subr.mxu0 0.0
    %600 = vmatpush1.msra.mxu0 %v561
    %601 = vmatprep.subr.mxu0 0.0
    %602 = vmatpush1.msra.mxu0 0.0
    %603 = vmatprep.subr.mxu0 0.0
    %604 = vmatpush1.msra.mxu0 0.0
    %605 = vmatprep.subr.mxu0 0.0
    %606 = vmatpush1.msra.mxu0 0.0
    %607 = vmatprep.subr.mxu0 0.0
    %608 = vmatpush1.msra.mxu0 0.0
    %609 = vmatprep.subr.mxu0 0.0
    %610 = vmatpush1.msra.mxu0 0.0
    %611 = vmatprep.subr.mxu0 0.0
    %612 = vmatpush1.msra.mxu0 0.0
    %613 = vmatprep.subr.mxu0 0.0
    %614 = vmatpush1.msra.mxu0 0.0
    %615 = vmatprep.subr.mxu0 0.0
    %616 = vmatpush1.msra.mxu0 0.0
    %617 = vmatprep.subr.mxu0 0.0
    %618 = vmatpush1.msra.mxu0 0.0
    %619 = vmatprep.subr.mxu0 0.0
    %620 = vmatpush1.msra.mxu0 0.0
    %621 = vmatprep.subr.mxu0 0.0
    %622 = vmatpush1.msra.mxu0 0.0
    %623 = vmatprep.subr.mxu0 0.0
    %624 = vmatpush1.msra.mxu0 0.0
    %625 = vmatprep.subr.mxu0 0.0
    %626 = vmatpush1.msra.mxu0 0.0
    %627 = vmatprep.subr.mxu0 0.0
    %628 = vmatpush1.msra.mxu0 0.0
    %629 = vmatprep.subr.mxu0 0.0
    %630 = vmatpush1.msra.mxu0 0.0
    %631 = vmatprep.subr.mxu0 0.0
    %632 = vmatpush1.msra.mxu0 0.0
    %633 = vmatprep.mubr.f32.mxu0 0.0
    %634 = vmatmul.mubr.f32.gmra.mrb[0].mxu0 %v545
    %v635 = vpop.f32.mrb[0].mxu0
    %v636 = vadd.f32 %v567, %v635
    %v637 = vpop.f32.mrb[0].mxu0
    %638 = vdwg.mxu0
    %639 = vst [vmem:[#allocation10] sm:$0xff] %v636
    %640 = vst [vmem:[#allocation11] sm:$0xff] %v545
    // Predicated region
    $region46: #{tpu_custom_call.1} parent=1 // pred_check
      _
    $region47: #{tpu_custom_call.1} parent=1 // pred_check_branch
      %642 = sbr.rel (0) target = $region49
    $region48: #{tpu_custom_call.1} parent=1 // pred_region
      %s644 = ssub.s32 128, 128
      %645 = vsyncadd [#allocation4], %s644
      %s647 = sshll.u32 [#allocation10], 4
      %s648 = int_to_ptr.vmem [resolvable:$true] %s647
      %650 = dma.vmem_to_hbm [thread:$0]  %s648, 128, %s7, [#allocation4]
    $region49: #{tpu_custom_call.1} parent=1 // pred_fallthru
      _
    // Predicated region
    $region50: #{tpu_custom_call.1} parent=1 // pred_check
      _
    $region51: #{tpu_custom_call.1} parent=1 // pred_check_branch
      %652 = sbr.rel (0) target = $region53
    $region52: #{tpu_custom_call.1} parent=1 // pred_region
      %s654 = ssub.s32 128, 128
      %655 = vsyncadd [#allocation12], %s654
      %s657 = sshll.u32 [#allocation11], 4
      %s658 = int_to_ptr.vmem [resolvable:$true] %s657
      %660 = dma.vmem_to_hbm [thread:$0]  %s658, 128, %s8, [#allocation12]
    $region53: #{tpu_custom_call.1} parent=1 // pred_fallthru
      _
    // Predicated region
    $region54: #{tpu_custom_call.1} parent=1 // pred_check
      _
    $region55: #{tpu_custom_call.1} parent=1 // pred_check_branch
      %662 = sbr.rel (0) target = $region57
    $region56: #{tpu_custom_call.1} parent=1 // pred_region
      %663 = dma.done [#allocation4], 128
    $region57: #{tpu_custom_call.1} parent=1 // pred_fallthru
      _
    // Predicated region
    $region58: #{tpu_custom_call.1} parent=1 // pred_check
      _
    $region59: #{tpu_custom_call.1} parent=1 // pred_check_branch
      %665 = sbr.rel (0) target = $region61
    $region60: #{tpu_custom_call.1} parent=1 // pred_region
      %666 = dma.done [#allocation12], 128
    $region61: #{tpu_custom_call.1} parent=1 // pred_fallthru
      _
    %667 = vsyncpa [#allocation3], 1
    %668 = vsyncpa [#allocation6], 1
    %669 = vsyncpa [#allocation9], 1
    %670 = vsyncpa [#allocation4], 1
    %671 = vsyncpa [#allocation12], 1

</llo_original>
